<compile_context>
chip_gen: v5e
topology: v5e:2x2
jax: 0.10.0
libtpu: 0.0.40
codegen_flags: <defaults>
</compile_context>

<pallas_src>
import functools
import math

import numpy as np
import jax
import jax.numpy as jnp
from jax.experimental import pallas as pl
from jax.experimental.pallas import tpu as pltpu


_LOG_PI = float(np.log(np.pi))

# ------------------- lgamma(alpha) - lgamma(alpha + 0.5) approximation ----------------
# Mosaic does not reliably lower lax.lgamma, so the *difference* is approximated as
#   f(a) = lgamma(a) - lgamma(a + 0.5) = g(1/a) - 0.5*log(a)
# with g fit as a degree-8 polynomial in x = 1/a (float64 least squares on Chebyshev
# nodes at import time).  Valid for alpha >= 1/_FIT_XMAX = 0.8; fit error << 1e-5.
_FIT_DEGREE = 8
_FIT_XMAX = 1.25


def _build_lgamma_diff_poly():
    t = np.linspace(0.0, np.pi, 4001)
    xs = 0.5 * _FIT_XMAX * (1.0 - np.cos(t))      # Chebyshev-style nodes in [0, xmax]
    gs = np.zeros_like(xs)
    pos = xs > 0
    a = 1.0 / xs[pos]
    gs[pos] = np.array(
        [math.lgamma(ai) - math.lgamma(ai + 0.5) + 0.5 * math.log(ai) for ai in a])
    p = np.polynomial.Polynomial.fit(xs, gs, deg=_FIT_DEGREE)
    coefs_low_first = p.convert().coef
    return tuple(float(c) for c in coefs_low_first[::-1])   # highest degree first


_GDIFF_COEFS = _build_lgamma_diff_poly()


def _horner(coefs, x):
    r = jnp.full_like(x, coefs[0])
    for c in coefs[1:]:
        r = r * x + c
    return r


# --------------------------------------- kernel ---------------------------------------
def _evidential_kernel(y_ref, ev_ref, out_ref, acc_ref, *,
                       coeff, n_total, tile_elems, masked, first_pad_tile):
    c = pl.program_id(0)
    i = pl.program_id(1)
    n_inner = pl.num_programs(1)

    @pl.when(i == 0)
    def _init():
        acc_ref[...] = jnp.zeros_like(acc_ref)

    y = y_ref[...]                       # (tile_rows, 128), lane-dense
    gamma = ev_ref[0]
    v = ev_ref[1]
    alpha = ev_ref[2]
    beta = ev_ref[3]

    diff = y - gamma
    two_beta = beta + beta
    b_term = two_beta + two_beta * v                   # 2*beta*(1 + v)
    a_term = v * diff * diff + b_term                  # v*(y-gamma)^2 + 2*beta*(1+v)

    log_a = jnp.log(a_term)
    log_b = jnp.log(b_term)
    log_va = jnp.log(v * alpha)

    # x = 1/alpha: approx EUP reciprocal + one Newton step (~24 bits), cheaper than a
    # full divide on the contested EUP slot.
    x = pl.reciprocal(alpha, approx=True)
    x = x * (2.0 - alpha * x)
    lgamma_diff = _horner(_GDIFF_COEFS, x)   # lgamma(a) - lgamma(a+0.5) + 0.5*log(a)

    # NIG_NLL without its constant 0.5*log(pi) (added once in the wrapper):
    #   -0.5*log(v) - alpha*log(B) + (alpha+0.5)*log(A) + lgamma(a) - lgamma(a+0.5)
    # = alpha*(log(A) - log(B)) + 0.5*(log(A) - log(v*alpha)) + g(1/alpha)
    nll = alpha * (log_a - log_b) + 0.5 * (log_a - log_va) + lgamma_diff
    # NIG_Reg (kl=False branch): |y - gamma| * (2*v + alpha)
    reg = jnp.abs(diff) * (v + v + alpha)
    elem = nll + coeff * reg

    def _accumulate(e):
        # Per-step partial reduction (VALU vreg adds + one XLU sublane reduce) into a
        # fixed (1, 128) resident slab, independent of tile size.
        acc_ref[...] += jnp.sum(e, axis=0, keepdims=True)

    if masked:
        gt = c * n_inner + i                           # global tile index

        @pl.when(gt < first_pad_tile)
        def _no_pad():
            _accumulate(elem)

        @pl.when(gt >= first_pad_tile)
        def _with_pad():
            shape = elem.shape
            ridx = jax.lax.broadcasted_iota(jnp.int32, shape, 0)
            lidx = jax.lax.broadcasted_iota(jnp.int32, shape, 1)
            gidx = gt * tile_elems + ridx * shape[1] + lidx
            _accumulate(jnp.where(gidx < n_total, elem, 0.0))
    else:
        _accumulate(elem)

    @pl.when(i == n_inner - 1)
    def _finalize():
        out_ref[...] = jnp.sum(acc_ref[...], keepdims=True)


def _round_up(x, m):
    return ((x + m - 1) // m) * m


def evidential_loss(y_true, evidential_output, coeff=1.0, *,
                    max_tile_elems=512 * 1024, max_splits=2):
    """Pallas implementation of EvidentialLoss.forward.

    y_true:             (N, 1) float32
    evidential_output:  (N, 4) float32  ([gamma, v, alpha, beta] along the last dim)
    returns:            scalar float32  (mean NLL + coeff * mean Reg)
    """
    n, one = y_true.shape
    assert one == 1 and evidential_output.shape == (n, 4)

    lanes = 128
    min_block = 8 * lanes                              # one (8, 128) f32 vreg tile
    tile_elems = min(max_tile_elems, _round_up(n, min_block))
    n_tiles = (n + tile_elems - 1) // tile_elems
    splits = max_splits if n_tiles >= max_splits else 1   # one partial per TensorCore
    n_tiles = _round_up(n_tiles, splits)
    n_pad = n_tiles * tile_elems
    rows = n_pad // lanes
    tile_rows = tile_elems // lanes
    tiles_per_split = n_tiles // splits
    masked = n_pad != n
    first_pad_tile = n // tile_elems                   # first tile containing padding

    # Component-major (4, rows, 128) slab (gamma / v / alpha / beta planes), lane-dense.
    # Padded entries keep every log / reciprocal argument finite; masked in-kernel.
    ev_t = evidential_output.astype(jnp.float32).T     # (4, N)
    y = y_true.astype(jnp.float32).reshape(-1)         # (N,)
    if masked:
        pad_vals = jnp.array([[0.0], [1.0], [1.0], [1.0]], jnp.float32)
        ev_t = jnp.concatenate(
            [ev_t, jnp.broadcast_to(pad_vals, (4, n_pad - n))], axis=1)
        y = jnp.concatenate([y, jnp.zeros((n_pad - n,), jnp.float32)])
    ev_planes = ev_t.reshape(4, rows, lanes)
    y = y.reshape(rows, lanes)

    kernel = functools.partial(
        _evidential_kernel, coeff=float(coeff), n_total=n, tile_elems=tile_elems,
        masked=masked, first_pad_tile=first_pad_tile)

    t = tiles_per_split
    partials = pl.pallas_call(
        kernel,
        out_shape=jax.ShapeDtypeStruct((splits, 1), jnp.float32),
        grid_spec=pltpu.PrefetchScalarGridSpec(
            num_scalar_prefetch=0,
            grid=(splits, tiles_per_split),
            in_specs=[
                pl.BlockSpec((tile_rows, lanes), lambda c, i: (c * t + i, 0)),
                pl.BlockSpec((4, tile_rows, lanes), lambda c, i: (0, c * t + i, 0)),
            ],
            out_specs=pl.BlockSpec((1, 1), lambda c, i: (c, 0)),
            scratch_shapes=[pltpu.VMEM((1, lanes), jnp.float32)],
        ),
        compiler_params=pltpu.CompilerParams(
            dimension_semantics=("parallel", "arbitrary"),
            vmem_limit_bytes=48 * 1024 * 1024,
        ),
    )(y, ev_planes)

    # Mean over the N valid elements; the constant 0.5*log(pi) of the NLL is hoisted.
    return jnp.sum(partials) * (1.0 / float(n)) + 0.5 * _LOG_PI


# ------------------------------------ pure-JAX ref ------------------------------------
def _reference(y, ev, coeff):
    gamma, v, alpha, beta = ev[:, 0:1], ev[:, 1:2], ev[:, 2:3], ev[:, 3:4]
    two_b_lambda = 2.0 * beta * (1.0 + v)
    nll = (0.5 * jnp.log(jnp.pi / v)
           - alpha * jnp.log(two_b_lambda)
           + (alpha + 0.5) * jnp.log(v * (y - gamma) ** 2 + two_b_lambda)
           + jax.scipy.special.gammaln(alpha)
           - jax.scipy.special.gammaln(alpha + 0.5))
    reg = jnp.abs(y - gamma) * (2.0 * v + alpha)
    return jnp.mean(nll) + coeff * jnp.mean(reg)


if __name__ == "__main__":
    def make_inputs(key, n):
        k_y, k_g, k_v, k_a, k_b = jax.random.split(key, 5)
        y_true = jax.random.normal(k_y, (n, 1), dtype=jnp.float32)
        gamma = jax.random.normal(k_g, (n, 1), dtype=jnp.float32)
        v = jax.nn.softplus(jax.random.normal(k_v, (n, 1), dtype=jnp.float32)) + 1e-2
        alpha = jax.nn.softplus(jax.random.normal(k_a, (n, 1), dtype=jnp.float32)) + 1.0
        beta = jax.nn.softplus(jax.random.normal(k_b, (n, 1), dtype=jnp.float32)) + 1e-2
        ev = jnp.concatenate([gamma, v, alpha, beta], axis=-1)  # (n, 4)
        return y_true, ev

    key1, key2 = jax.random.split(jax.random.PRNGKey(0))
    coeff = 1.0

    # Case 1: single-tile path (default tiling), small shape.
    y1, ev1 = make_inputs(key1, 256)
    loss1 = jax.block_until_ready(evidential_loss(y1, ev1, coeff=coeff))
    ref1 = jax.block_until_ready(_reference(y1, ev1, coeff))
    assert np.isfinite(float(loss1))
    np.testing.assert_allclose(float(loss1), float(ref1), rtol=1e-4, atol=1e-4)

    # Case 2: multi-tile path with tiny tiles to exercise the split grid, per-core
    # accumulators and the gated padding mask (2500 elements -> 4 tiles of 1024).
    y2, ev2 = make_inputs(key2, 2500)
    loss2 = jax.block_until_ready(
        evidential_loss(y2, ev2, coeff=coeff, max_tile_elems=1024))
    ref2 = jax.block_until_ready(_reference(y2, ev2, coeff))
    assert np.isfinite(float(loss2))
    np.testing.assert_allclose(float(loss2), float(ref2), rtol=1e-4, atol=1e-4)

    print("KERNEL_OK")
</pallas_src>

<mosaic_0001>
module attributes {stable_mosaic.version = 11 : i64} {
  func.func @_evidential_kernel(%arg0: i32, %arg1: i32, %arg2: memref<8x128xf32, #tpu.memory_space<vmem>>, %arg3: memref<4x8x128xf32, #tpu.memory_space<vmem>>, %arg4: memref<1x1xf32, #tpu.memory_space<vmem>>, %arg5: memref<1x128xf32, #tpu.memory_space<vmem>>) attributes {dimension_semantics = [#tpu.dimension_semantics<parallel>, #tpu.dimension_semantics<arbitrary>], iteration_bounds = array<i64: 1, 1>, scalar_prefetch = 0 : i64, scratch_operands = 1 : i64, tpu.core_type = #tpu.core_type<tc>, window_params = [{transform_indices = @transform_0, window_bounds = array<i64: 8, 128>}, {transform_indices = @transform_1, window_bounds = array<i64: 4, 8, 128>}, {transform_indices = @transform_2, window_bounds = array<i64: 1, 1>}]} {
    %c0_i32 = arith.constant 0 : i32
    %0 = arith.cmpi eq, %arg1, %c0_i32 : i32
    %1 = arith.extui %0 : i1 to i32
    %c0_i32_0 = arith.constant 0 : i32
    %2 = arith.cmpi ne, %1, %c0_i32_0 : i32
    scf.if %2 {
      %cst_28 = arith.constant 0.000000e+00 : f32
      %78 = vector.broadcast %cst_28 : f32 to vector<1x128xf32>
      %c0_29 = arith.constant 0 : index
      %c0_30 = arith.constant 0 : index
      %79 = vector.load %arg5[%c0_29, %c0_30] : memref<1x128xf32, #tpu.memory_space<vmem>>, vector<1x128xf32>
      tpu.vector_store %arg5[%c0_29, %c0_30], %78 {strides = array<i32>} : memref<1x128xf32, #tpu.memory_space<vmem>>, vector<1x128xf32>,
    } else {
    }
    %c0 = arith.constant 0 : index
    %c0_1 = arith.constant 0 : index
    %3 = vector.load %arg2[%c0, %c0_1] : memref<8x128xf32, #tpu.memory_space<vmem>>, vector<8x128xf32>
    %c0_2 = arith.constant 0 : index
    %c0_3 = arith.constant 0 : index
    %c0_4 = arith.constant 0 : index
    %4 = vector.load %arg3[%c0_2, %c0_3, %c0_4] : memref<4x8x128xf32, #tpu.memory_space<vmem>>, vector<1x8x128xf32>
    %5 = vector.shape_cast %4 : vector<1x8x128xf32> to vector<8x128xf32>
    %c1 = arith.constant 1 : index
    %c0_5 = arith.constant 0 : index
    %c0_6 = arith.constant 0 : index
    %6 = vector.load %arg3[%c1, %c0_5, %c0_6] : memref<4x8x128xf32, #tpu.memory_space<vmem>>, vector<1x8x128xf32>
    %7 = vector.shape_cast %6 : vector<1x8x128xf32> to vector<8x128xf32>
    %c2 = arith.constant 2 : index
    %c0_7 = arith.constant 0 : index
    %c0_8 = arith.constant 0 : index
    %8 = vector.load %arg3[%c2, %c0_7, %c0_8] : memref<4x8x128xf32, #tpu.memory_space<vmem>>, vector<1x8x128xf32>
    %9 = vector.shape_cast %8 : vector<1x8x128xf32> to vector<8x128xf32>
    %c3 = arith.constant 3 : index
    %c0_9 = arith.constant 0 : index
    %c0_10 = arith.constant 0 : index
    %10 = vector.load %arg3[%c3, %c0_9, %c0_10] : memref<4x8x128xf32, #tpu.memory_space<vmem>>, vector<1x8x128xf32>
    %11 = vector.shape_cast %10 : vector<1x8x128xf32> to vector<8x128xf32>
    %12 = arith.subf %3, %5 : vector<8x128xf32>
    %13 = arith.addf %11, %11 : vector<8x128xf32>
    %14 = arith.mulf %13, %7 : vector<8x128xf32>
    %15 = arith.addf %13, %14 : vector<8x128xf32>
    %16 = arith.mulf %7, %12 : vector<8x128xf32>
    %17 = arith.mulf %16, %12 : vector<8x128xf32>
    %18 = arith.addf %17, %15 : vector<8x128xf32>
    %19 = math.log %18 : vector<8x128xf32>
    %20 = math.log %15 : vector<8x128xf32>
    %21 = arith.mulf %7, %9 : vector<8x128xf32>
    %22 = math.log %21 : vector<8x128xf32>
    %23 = tpu.reciprocal %9 {approx = true} : vector<8x128xf32> -> vector<8x128xf32>
    %24 = arith.mulf %9, %23 : vector<8x128xf32>
    %cst = arith.constant 2.000000e+00 : f32
    %25 = vector.broadcast %cst : f32 to vector<8x128xf32>
    %26 = arith.subf %25, %24 : vector<8x128xf32>
    %27 = arith.mulf %23, %26 : vector<8x128xf32>
    %cst_11 = arith.constant -8.48463314E-5 : f32
    %28 = vector.broadcast %cst_11 : f32 to vector<8x128xf32>
    %29 = arith.mulf %28, %27 : vector<8x128xf32>
    %cst_12 = arith.constant 5.90578187E-4 : f32
    %30 = vector.broadcast %cst_12 : f32 to vector<8x128xf32>
    %31 = arith.addf %29, %30 : vector<8x128xf32>
    %32 = arith.mulf %31, %27 : vector<8x128xf32>
    %cst_13 = arith.constant -0.00172551395 : f32
    %33 = vector.broadcast %cst_13 : f32 to vector<8x128xf32>
    %34 = arith.addf %32, %33 : vector<8x128xf32>
    %35 = arith.mulf %34, %27 : vector<8x128xf32>
    %cst_14 = arith.constant 0.00242128619 : f32
    %36 = vector.broadcast %cst_14 : f32 to vector<8x128xf32>
    %37 = arith.addf %35, %36 : vector<8x128xf32>
    %38 = arith.mulf %37, %27 : vector<8x128xf32>
    %cst_15 = arith.constant -2.483310e-04 : f32
    %39 = vector.broadcast %cst_15 : f32 to vector<8x128xf32>
    %40 = arith.addf %38, %39 : vector<8x128xf32>
    %41 = arith.mulf %40, %27 : vector<8x128xf32>
    %cst_16 = arith.constant -0.00516769756 : f32
    %42 = vector.broadcast %cst_16 : f32 to vector<8x128xf32>
    %43 = arith.addf %41, %42 : vector<8x128xf32>
    %44 = arith.mulf %43, %27 : vector<8x128xf32>
    %cst_17 = arith.constant -3.34138804E-6 : f32
    %45 = vector.broadcast %cst_17 : f32 to vector<8x128xf32>
    %46 = arith.addf %44, %45 : vector<8x128xf32>
    %47 = arith.mulf %46, %27 : vector<8x128xf32>
    %cst_18 = arith.constant 0.125000104 : f32
    %48 = vector.broadcast %cst_18 : f32 to vector<8x128xf32>
    %49 = arith.addf %47, %48 : vector<8x128xf32>
    %50 = arith.mulf %49, %27 : vector<8x128xf32>
    %cst_19 = arith.constant -5.32489219E-10 : f32
    %51 = vector.broadcast %cst_19 : f32 to vector<8x128xf32>
    %52 = arith.addf %50, %51 : vector<8x128xf32>
    %53 = arith.subf %19, %20 : vector<8x128xf32>
    %54 = arith.mulf %9, %53 : vector<8x128xf32>
    %55 = arith.subf %19, %22 : vector<8x128xf32>
    %cst_20 = arith.constant 5.000000e-01 : f32
    %56 = vector.broadcast %cst_20 : f32 to vector<8x128xf32>
    %57 = arith.mulf %56, %55 : vector<8x128xf32>
    %58 = arith.addf %54, %57 : vector<8x128xf32>
    %59 = arith.addf %58, %52 : vector<8x128xf32>
    %60 = math.absf %12 : vector<8x128xf32>
    %61 = arith.addf %7, %7 : vector<8x128xf32>
    %62 = arith.addf %61, %9 : vector<8x128xf32>
    %63 = arith.mulf %60, %62 : vector<8x128xf32>
    %cst_21 = arith.constant 1.000000e+00 : f32
    %64 = vector.broadcast %cst_21 : f32 to vector<8x128xf32>
    %65 = arith.mulf %64, %63 : vector<8x128xf32>
    %66 = arith.addf %59, %65 : vector<8x128xf32>
    %c1_i32 = arith.constant 1 : i32
    %67 = arith.muli %arg0, %c1_i32 : i32
    %68 = arith.addi %67, %arg1 : i32
    %c0_i32_22 = arith.constant 0 : i32
    %69 = arith.cmpi slt, %68, %c0_i32_22 : i32
    %70 = arith.extui %69 : i1 to i32
    %c0_i32_23 = arith.constant 0 : i32
    %71 = arith.cmpi ne, %70, %c0_i32_23 : i32
    scf.if %71 {
      %c0_28 = arith.constant 0 : index
      %c0_29 = arith.constant 0 : index
      %78 = vector.load %arg5[%c0_28, %c0_29] : memref<1x128xf32, #tpu.memory_space<vmem>>, vector<1x128xf32>
      %cst_30 = arith.constant dense<0.000000e+00> : vector<128xf32>
      %79 = vector.multi_reduction <add>, %66, %cst_30 [0] : vector<8x128xf32> to vector<128xf32>
      %80 = vector.shape_cast %79 : vector<128xf32> to vector<1x128xf32>
      %81 = arith.addf %78, %80 : vector<1x128xf32>
      %c0_31 = arith.constant 0 : index
      %c0_32 = arith.constant 0 : index
      %82 = vector.load %arg5[%c0_31, %c0_32] : memref<1x128xf32, #tpu.memory_space<vmem>>, vector<1x128xf32>
      tpu.vector_store %arg5[%c0_31, %c0_32], %81 {strides = array<i32>} : memref<1x128xf32, #tpu.memory_space<vmem>>, vector<1x128xf32>,
    } else {
    }
    %c0_i32_24 = arith.constant 0 : i32
    %72 = arith.cmpi sge, %68, %c0_i32_24 : i32
    %73 = arith.extui %72 : i1 to i32
    %c0_i32_25 = arith.constant 0 : i32
    %74 = arith.cmpi ne, %73, %c0_i32_25 : i32
    scf.if %74 {
      %78 = tpu.iota {dimensions = array<i32: 0>} : vector<8x128xi32>
      %79 = tpu.iota {dimensions = array<i32: 1>} : vector<8x128xi32>
      %c1024_i32 = arith.constant 1024 : i32
      %80 = arith.muli %68, %c1024_i32 : i32
      %c128_i32 = arith.constant 128 : i32
      %81 = vector.broadcast %c128_i32 : i32 to vector<8x128xi32>
      %82 = arith.muli %78, %81 : vector<8x128xi32>
      %83 = vector.broadcast %80 : i32 to vector<8x128xi32>
      %84 = arith.addi %83, %82 : vector<8x128xi32>
      %85 = arith.addi %84, %79 : vector<8x128xi32>
      %c256_i32 = arith.constant 256 : i32
      %86 = vector.broadcast %c256_i32 : i32 to vector<8x128xi32>
      %87 = arith.cmpi slt, %85, %86 : vector<8x128xi32>
      %cst_28 = arith.constant 0.000000e+00 : f32
      %88 = vector.broadcast %cst_28 : f32 to vector<8x128xf32>
      %89 = arith.select %87, %66, %88 : vector<8x128xi1>, vector<8x128xf32>
      %c0_29 = arith.constant 0 : index
      %c0_30 = arith.constant 0 : index
      %90 = vector.load %arg5[%c0_29, %c0_30] : memref<1x128xf32, #tpu.memory_space<vmem>>, vector<1x128xf32>
      %cst_31 = arith.constant dense<0.000000e+00> : vector<128xf32>
      %91 = vector.multi_reduction <add>, %89, %cst_31 [0] : vector<8x128xf32> to vector<128xf32>
      %92 = vector.shape_cast %91 : vector<128xf32> to vector<1x128xf32>
      %93 = arith.addf %90, %92 : vector<1x128xf32>
      %c0_32 = arith.constant 0 : index
      %c0_33 = arith.constant 0 : index
      %94 = vector.load %arg5[%c0_32, %c0_33] : memref<1x128xf32, #tpu.memory_space<vmem>>, vector<1x128xf32>
      tpu.vector_store %arg5[%c0_32, %c0_33], %93 {strides = array<i32>} : memref<1x128xf32, #tpu.memory_space<vmem>>, vector<1x128xf32>,
    } else {
    }
    %c0_i32_26 = arith.constant 0 : i32
    %75 = arith.cmpi eq, %arg1, %c0_i32_26 : i32
    %76 = arith.extui %75 : i1 to i32
    %c0_i32_27 = arith.constant 0 : i32
    %77 = arith.cmpi ne, %76, %c0_i32_27 : i32
    scf.if %77 {
      %c0_28 = arith.constant 0 : index
      %c0_29 = arith.constant 0 : index
      %78 = vector.load %arg5[%c0_28, %c0_29] : memref<1x128xf32, #tpu.memory_space<vmem>>, vector<1x128xf32>
      %79 = vector.shape_cast %78 : vector<1x128xf32> to vector<1x1x128xf32>
      %cst_30 = arith.constant dense<0.000000e+00> : vector<1xf32>
      %80 = vector.multi_reduction <add>, %79, %cst_30 [1, 2] : vector<1x1x128xf32> to vector<1xf32>
      %81 = vector.shape_cast %80 : vector<1xf32> to vector<1x1x1xf32>
      %82 = vector.extract %81[0, 0, 0] : f32 from vector<1x1x1xf32>
      %83 = vector.broadcast %82 : f32 to vector<1x1xf32>
      %c0_31 = arith.constant 0 : index
      %c0_32 = arith.constant 0 : index
      %84 = vector.load %arg4[%c0_31, %c0_32] : memref<1x1xf32, #tpu.memory_space<vmem>>, vector<1x1xf32>
      tpu.vector_store %arg4[%c0_31, %c0_32], %83 {strides = array<i32>} : memref<1x1xf32, #tpu.memory_space<vmem>>, vector<1x1xf32>,
    } else {
    }
    return
  }
  func.func @transform_0(%arg0: i32, %arg1: i32) -> (i32, i32) {
    %c1_i32 = arith.constant 1 : i32
    %0 = arith.muli %arg0, %c1_i32 : i32
    %1 = arith.addi %0, %arg1 : i32
    %c0_i32 = arith.constant 0 : i32
    %c0_i32_0 = arith.constant 0 : i32
    return %1, %c0_i32 : i32, i32
  }
  func.func @transform_1(%arg0: i32, %arg1: i32) -> (i32, i32, i32) {
    %c1_i32 = arith.constant 1 : i32
    %0 = arith.muli %arg0, %c1_i32 : i32
    %1 = arith.addi %0, %arg1 : i32
    %c0_i32 = arith.constant 0 : i32
    %c0_i32_0 = arith.constant 0 : i32
    %c0_i32_1 = arith.constant 0 : i32
    return %c0_i32, %1, %c0_i32_0 : i32, i32, i32
  }
  func.func @transform_2(%arg0: i32, %arg1: i32) -> (i32, i32) {
    %c0_i32 = arith.constant 0 : i32
    %c0_i32_0 = arith.constant 0 : i32
    return %arg0, %c0_i32 : i32, i32
  }
}

</mosaic_0001>

<llo_original>
// kernel: tpu_custom_call.1
$region0: #{tpu_custom_call.1}
  #allocation0 [shape = 'u32[]', space=smem, size = 0x4, offset = 0x4, fixed_abs, tag = 'smem constant byte address 0x4 - core index']
  #allocation1 [shape = 'u32[72,128]{1,0:T(1,128)}', space=vmem, size = 0x9000, scoped, tag = 'internal scratch']
  #allocation2 [shape = 'f32[1,128]{1,0:T(1,128)}', space=vmem, size = 0x200, scoped, tag = 'scratch operand']
  %s0 = inlined_call_operand.hbm [shape: f32[8,128], index: 0, kind: input, shape index: {}]
  %s1 = inlined_call_operand.hbm [shape: f32[4,8,128], index: 1, kind: input, shape index: {}]
  %s2 = inlined_call_operand.hbm [shape: f32[1,1], index: 2, kind: output, shape index: {}]
  %s3 = sld [smem:[#allocation0]]
  $region42: #{tpu_custom_call.1} parent=0
    _
  %s5 = ssub.s32 1, %s3
  %s6 = scalar_select 0, %s5, %s3
  $region1: #{tpu_custom_call.1} parent=0
    #allocation3 [shape = 'u8[4096]{0}', space=vmem, size = 0x1000, scoped, tag = 'input window, operand 0, single buffered']
    #allocation4 [shape = 's32[1]{0}', space=sflag, size = 0x4, scoped, tag = 'scoped memory for tpu_custom_call.1']
    #allocation5 [shape = 's32[1]{0}', space=sflag, size = 0x4, scoped, tag = 'scoped memory for tpu_custom_call.1']
    #allocation6 [shape = 'u8[16384]{0}', space=vmem, size = 0x4000, scoped, tag = 'input window, operand 1, single buffered']
    #allocation7 [shape = 's32[1]{0}', space=sflag, size = 0x4, scoped, tag = 'scoped memory for tpu_custom_call.1']
    #allocation8 [shape = 'u8[512]{0}', space=vmem, size = 0x400, scoped, tag = 'output window, operand 0, single buffered']
    %7 = vsyncpa [#allocation4], 0
    %8 = vsyncpa [#allocation7], 0
    %9 = vsyncpa [#allocation5], 0
    // Predicated region
    $region2: #{tpu_custom_call.1} parent=1 // pred_check
      _
    $region3: #{tpu_custom_call.1} parent=1 // pred_check_branch
      %11 = sbr.rel (0) target = $region5
    $region4: #{tpu_custom_call.1} parent=1 // pred_region
      %s12 = sadd.s32 0, 0
      %14 = vsyncadd [#allocation4], 0
      %s15 = smul.addr %s12, 8
      %s16 = scalar_lea.hbm %s0, %s15
      %s18 = sshll.u32 %s16, 4
      %s19 = int_to_ptr.hbm [resolvable:$true] %s18
      %s20 = sshll.u32 [#allocation3], 4
      %s21 = int_to_ptr.vmem [resolvable:$true] %s20
      %23 = dma.hbm_to_vmem [thread:$0]  %s19, 128, %s21, [#allocation4]
    $region5: #{tpu_custom_call.1} parent=1 // pred_fallthru
      _
    // Predicated region
    $region6: #{tpu_custom_call.1} parent=1 // pred_check
      _
    $region7: #{tpu_custom_call.1} parent=1 // pred_check_branch
      %25 = sbr.rel (0) target = $region9
    $region8: #{tpu_custom_call.1} parent=1 // pred_region
      %s26 = sadd.s32 0, 0
      %28 = vsyncadd [#allocation7], 0
      %s29 = smul.addr %s26, 8
      %s30 = scalar_lea.hbm %s1, %s29
      %s31 = sshll.u32 %s30, 4
      %s32 = int_to_ptr.hbm [resolvable:$true] %s31
      %s33 = sshll.u32 [#allocation6], 4
      %s34 = int_to_ptr.vmem [resolvable:$true] %s33
      %39 = dma.hbm_to_vmem [thread:$0]  %s32, 512, %s34, [#allocation7], 128, 128, 8
    $region9: #{tpu_custom_call.1} parent=1 // pred_fallthru
      _
    // Predicated region
    $region10: #{tpu_custom_call.1} parent=1 // pred_check
      _
    $region11: #{tpu_custom_call.1} parent=1 // pred_check_branch
      %41 = sbr.rel (0) target = $region13
    $region12: #{tpu_custom_call.1} parent=1 // pred_region
      %43 = dma.done [#allocation4], 128
    $region13: #{tpu_custom_call.1} parent=1 // pred_fallthru
      _
    // Predicated region
    $region14: #{tpu_custom_call.1} parent=1 // pred_check
      _
    $region15: #{tpu_custom_call.1} parent=1 // pred_check_branch
      %45 = sbr.rel (0) target = $region17
    $region16: #{tpu_custom_call.1} parent=1 // pred_region
      %47 = dma.done [#allocation7], 512
    $region17: #{tpu_custom_call.1} parent=1 // pred_fallthru
      _
    %s48 = sadd.s32 0, 0
    %s49 = sadd.s32 0, 0
    %p50 = scmp.eq.s32.totalorder 0, 0
    // Predicated region
    $region18: #{tpu_custom_call.1} parent=1 // pred_check
      %p51 = pneg %p50
    $region19: #{tpu_custom_call.1} parent=1 // pred_check_branch
      %53 = sbr.rel (%p51) target = $region21
    $region20: #{tpu_custom_call.1} parent=1 // pred_region
      %54 = vst [vmem:[#allocation2] sm:$0x1] 0.0
    $region21: #{tpu_custom_call.1} parent=1 // pred_fallthru
      _
    %v55 = vld [vmem:[#allocation3] sm:$0xff]
    %v56 = vld [vmem:[#allocation6] sm:$0xff]
    %s57 = scalar_lea.vmem [#allocation6], 8
    %v58 = vld [vmem:[%s57] sm:$0xff]
    %s59 = scalar_lea.vmem [#allocation6], 16
    %v60 = vld [vmem:[%s59] sm:$0xff]
    %s61 = scalar_lea.vmem [#allocation6], 24
    %v62 = vld [vmem:[%s61] sm:$0xff]
    %v63 = vsub.f32 %v55, %v56
    %v64 = vadd.f32 %v62, %v62
    %v65 = vmul.f32 %v64, %v58
    %v66 = vadd.f32 %v64, %v65
    %v67 = vmul.f32 %v58, %v63
    %v68 = vmul.f32 %v67, %v63
    %v69 = vadd.f32 %v68, %v66
    %v70 = vlog2.pop %v69
    %v71 = vmul.f32 %v70, 0.6931472
    %v72 = vlog2.pop %v66
    %v73 = vmul.f32 %v72, 0.6931472
    %v74 = vmul.f32 %v58, %v60
    %v75 = vlog2.pop %v74
    %v76 = vmul.f32 %v75, 0.6931472
    %v77 = vrcp.pop %v60
    %v78 = vmul.f32 %v60, %v77
    %v79 = vsub.f32 2.0, %v78
    %v80 = vmul.f32 %v77, %v79
    %v81 = vmul.f32 %v80, -8.484633e-05
    %v82 = vadd.f32 %v81, 0.0005905782
    %v83 = vmul.f32 %v82, %v80
    %v84 = vadd.f32 %v83, -0.001725514
    %v85 = vmul.f32 %v84, %v80
    %v86 = vadd.f32 %v85, 0.0024212862
    %v87 = vmul.f32 %v86, %v80
    %v88 = vadd.f32 %v87, -0.000248331
    %v89 = vmul.f32 %v88, %v80
    %v90 = vadd.f32 %v89, -0.0051676976
    %v91 = vmul.f32 %v90, %v80
    %v92 = vadd.f32 %v91, -3.341388e-06
    %v93 = vmul.f32 %v92, %v80
    %v94 = vadd.f32 %v93, 0.1250001
    %v95 = vmul.f32 %v94, %v80
    %v96 = vadd.f32 %v95, -5.324892e-10
    %v97 = vsub.f32 %v71, %v73
    %v98 = vmul.f32 %v60, %v97
    %v99 = vsub.f32 %v71, %v76
    %v100 = vmul.f32 %v99, 0.5
    %v101 = vadd.f32 %v98, %v100
    %v102 = vadd.f32 %v101, %v96
    %v103 = vand.u32 2147483647, %v63
    %v104 = vadd.f32 %v58, %v58
    %v105 = vadd.f32 %v104, %v60
    %v106 = vmul.f32 %v103, %v105
    %v107 = vadd.f32 %v102, %v106
    %s108 = sadd.s32 0, 0
    %p109 = scmp.lt.s32.totalorder %s108, 0
    // Predicated region
    $region22: #{tpu_custom_call.1} parent=1 // pred_check
      %p110 = pneg %p109
    $region23: #{tpu_custom_call.1} parent=1 // pred_check_branch
      %112 = sbr.rel (%p110) target = $region25
    $region24: #{tpu_custom_call.1} parent=1 // pred_region
      %v113 = vld [vmem:[#allocation2] sm:$0x1]
      %v114 = vrot.slane %v107, 4
      %v115 = vadd.f32 %v107, %v114
      %v116 = vrot.slane %v115, 2
      %v117 = vadd.f32 %v115, %v116
      %v118 = vrot.slane %v117, 1
      %v119 = vadd.f32 %v117, %v118
      %v120 = vadd.f32 %v113, %v119
      %121 = vst [vmem:[#allocation2] sm:$0x1] %v120
    $region25: #{tpu_custom_call.1} parent=1 // pred_fallthru
      _
    %p122 = scmp.ge.s32.totalorder %s108, 0
    // Predicated region
    $region26: #{tpu_custom_call.1} parent=1 // pred_check
      %p123 = pneg %p122
    $region27: #{tpu_custom_call.1} parent=1 // pred_check_branch
      %125 = sbr.rel (%p123) target = $region29
    $region28: #{tpu_custom_call.1} parent=1 // pred_region
      %v126 = vlaneseq
      %v127 = vshrl.u32 %v126, 7
      %v128 = vlaneseq
      %v129 = vand.u32 %v128, 127
      %s130 = smul.u32 %s108, 1024
      %v131 = vmul.u32 %v127, 128
      %v132 = vstv %s130
      %v133 = vadd.s32 %v132, %v131
      %v134 = vadd.s32 %v133, %v129
      %vm135 = vcmp.lt.s32.totalorder %v134, 256
      %v136 = vsel %vm135, %v107, 0.0
      %v137 = vld [vmem:[#allocation2] sm:$0x1]
      %v138 = vrot.slane %v136, 4
      %v139 = vadd.f32 %v136, %v138
      %v140 = vrot.slane %v139, 2
      %v141 = vadd.f32 %v139, %v140
      %v142 = vrot.slane %v141, 1
      %v143 = vadd.f32 %v141, %v142
      %v144 = vadd.f32 %v137, %v143
      %145 = vst [vmem:[#allocation2] sm:$0x1] %v144
    $region29: #{tpu_custom_call.1} parent=1 // pred_fallthru
      _
    // Predicated region
    $region30: #{tpu_custom_call.1} parent=1 // pred_check
      %p146 = pneg %p50
    $region31: #{tpu_custom_call.1} parent=1 // pred_check_branch
      %148 = sbr.rel (%p146) target = $region33
    $region32: #{tpu_custom_call.1} parent=1 // pred_region
      %v149 = vld [vmem:[#allocation2] sm:$0x1]
      %vm150 = vcmask 1040384
      %v151 = vsel %vm150, %v149, 0.0
      %152 = vadd.xlane.f32.xlu0 %v151
      %v153 = vpop.xlane.xlu0 %152
      %v154 = vrot.slane %v153, 4
      %v155 = vadd.f32 %v153, %v154
      %v156 = vrot.slane %v155, 2
      %v157 = vadd.f32 %v155, %v156
      %v158 = vrot.slane %v157, 1
      %v159 = vadd.f32 %v157, %v158
      %s160 = vtos %v159
      %v161 = vstv %s160
      %vm162 = vcmask 0
      %163 = vst.msk [vmem:[#allocation8] sm:$0x1] %vm162, %v161
    $region33: #{tpu_custom_call.1} parent=1 // pred_fallthru
      _
    // Predicated region
    $region34: #{tpu_custom_call.1} parent=1 // pred_check
      _
    $region35: #{tpu_custom_call.1} parent=1 // pred_check_branch
      %165 = sbr.rel (0) target = $region37
    $region36: #{tpu_custom_call.1} parent=1 // pred_region
      %167 = vsyncadd [#allocation5], 0
      %s169 = sshll.u32 [#allocation8], 4
      %s170 = int_to_ptr.vmem [resolvable:$true] %s169
      %s171 = sshll.u32 %s2, 4
      %s172 = int_to_ptr.hbm [resolvable:$true] %s171
      %174 = dma.vmem_to_hbm [thread:$0]  %s170, 16, %s172, [#allocation5]
    $region37: #{tpu_custom_call.1} parent=1 // pred_fallthru
      _
    // Predicated region
    $region38: #{tpu_custom_call.1} parent=1 // pred_check
      _
    $region39: #{tpu_custom_call.1} parent=1 // pred_check_branch
      %176 = sbr.rel (0) target = $region41
    $region40: #{tpu_custom_call.1} parent=1 // pred_region
      %178 = dma.done [#allocation5], 16
    $region41: #{tpu_custom_call.1} parent=1 // pred_fallthru
      _
    %179 = vsyncpa [#allocation4], 1
    %180 = vsyncpa [#allocation7], 1
    %181 = vsyncpa [#allocation5], 1

</llo_original>
